<compile_context>
chip_gen: v7x
topology: tpu7x:2x2x1
jax: 0.10.0
libtpu: 0.0.40
codegen_flags: <defaults>
</compile_context>

<pallas_src>
import jax
import jax.numpy as jnp
from jax.experimental import pallas as pl
from jax.experimental.pallas import tpu as pltpu


def _round_up(x, m):
    return (x + m - 1) // m * m


def _cdiv(a, b):
    return -(-a // b)


def _vmem_limit_bytes():
    """~75% of physical VMEM: ≈48 MiB on v7x (64 MiB), ≈96 MiB on v5e/v6e."""
    try:
        cap = pltpu.get_tpu_info().vmem_capacity_bytes
    except Exception:
        cap = 64 * 1024 * 1024  # conservative fallback (v7x-sized)
    return int(min(cap * 3 // 4, 100 * 1024 * 1024))


def lstm_cell_kernel(xh_ref, c_ref, w_ref, b_ref, h_out_ref, c_out_ref):
    """One (hidden-tile, batch-tile) block of the LSTM cell.

    xh_ref : (tb, K_pad)      pre-cast [x | h] slab (matmul dtype)
    c_ref  : (tb, th)         previous cell state, this hidden tile (f32)
    w_ref  : (K_pad, 4*th)    fused [Wx; Wh] slab, columns [f|i|o|u]
    b_ref  : (1, 4*th)        bias, same column layout (f32)
    h_out_ref, c_out_ref : (tb, th)
    """
    th = c_ref.shape[-1]

    # One fused gate projection on the MXU with f32 accumulation.
    gates = jnp.dot(xh_ref[...], w_ref[...], preferred_element_type=jnp.float32)
    gates += b_ref[...].astype(jnp.float32)

    # Lane-aligned gate slices (th is a multiple of 128): [f | i | o | u].
    f = jax.nn.sigmoid(gates[:, 0 * th:1 * th])
    i = jax.nn.sigmoid(gates[:, 1 * th:2 * th])
    o = jax.nn.sigmoid(gates[:, 2 * th:3 * th])
    u = jnp.tanh(gates[:, 3 * th:4 * th])

    # All elementwise gating / cell-state math in f32 (VPU/EUP).
    new_c = i * u + f * c_ref[...].astype(jnp.float32)
    new_h = o * jnp.tanh(new_c)

    c_out_ref[...] = new_c.astype(c_out_ref.dtype)
    h_out_ref[...] = new_h.astype(h_out_ref.dtype)


def prepare_lstm_params(weight, bias, *, input_size, hidden_size, tile_h=None,
                        weight_dtype=jnp.bfloat16):
    """One-time parameter prep (hoist out of any per-timestep path).

    weight : (4*H, D+H)  nn.Linear.weight of fiou_linear, row blocks [f|i|o|u]
    bias   : (4*H,)      nn.Linear.bias

    Returns a dict with:
      w : (nH, K_pad, 4*tile_h)  contiguous per-hidden-tile fused [Wx; Wh]
                                 slabs, column layout [f|i|o|u] per tile
      b : (nH, 1, 4*tile_h)      bias, same layout (f32)
    """
    H, D = hidden_size, input_size
    four_h, K = weight.shape
    assert four_h == 4 * H and K == D + H, "weight must be (4*hidden, input+hidden)"

    if tile_h is None:
        # Bigger gate tiles amortize per-grid-step overhead on v5e/v6e; 128 is
        # plenty for small H and keeps v7x (64 MiB VMEM) comfortable.
        tile_h = 256 if H >= 256 else 128
    th = tile_h
    assert th % 128 == 0, "tile_h must be a multiple of 128 (lane width)"

    H_pad = _round_up(H, th)
    nH = H_pad // th
    K_pad = _round_up(K, 16)  # sublane-aligned for f32 and packed bf16

    # (4H, K) -> (K, 4, H): single prep-time transpose of the fused weight.
    w_t = weight.T.astype(weight_dtype).reshape(K, 4, H)
    w_t = jnp.pad(w_t, ((0, K_pad - K), (0, 0), (0, H_pad - H)))
    # Re-block so each hidden tile owns one contiguous (K_pad, 4*th) slab
    # whose columns are [f | i | o | u] for that tile's hidden units.
    w_t = (w_t.reshape(K_pad, 4, nH, th)
              .transpose(2, 0, 1, 3)
              .reshape(nH, K_pad, 4 * th))

    b = bias.astype(jnp.float32).reshape(4, H)
    b = jnp.pad(b, ((0, 0), (0, H_pad - H)))
    b = b.reshape(4, nH, th).transpose(1, 0, 2).reshape(nH, 1, 4 * th)

    return dict(w=w_t, b=b, D=D, H=H, H_pad=H_pad, K_pad=K_pad, th=th,
                compute_dtype=weight_dtype)


def lstm_cell(x, h, c, params):
    """One LSTM-cell step with pre-prepared params.

    x : (B, D);  h, c : (B, H).  Returns (new_h, new_c), each (B, H).
    """
    w, b = params["w"], params["b"]
    D, H = params["D"], params["H"]
    H_pad, K_pad, th = params["H_pad"], params["K_pad"], params["th"]
    cdt = params["compute_dtype"]

    B = x.shape[0]
    K = D + H
    nh = H_pad // th

    # Balanced batch tiling: minimize padding, stay sublane (8) aligned.
    nb_t = _cdiv(B, 128)
    tb = _round_up(_cdiv(B, nb_t), 8)
    B_pad = _round_up(B, tb)
    nb = B_pad // tb

    # If the grid collapsed to a single block, split the batch tile (only when
    # it costs no extra padding) so both v7x TensorCores get work.
    if nb * nh == 1 and tb >= 16 and tb % 16 == 0:
        tb //= 2
        nb = 2

    # Single fused [x | h] operand, pre-cast ONCE to the matmul dtype in the
    # wrapper (no per-grid-step casts inside the kernel).
    xh = jnp.concatenate([x, h], axis=1).astype(cdt)
    if (B_pad, K_pad) != xh.shape:
        xh = jnp.pad(xh, ((0, B_pad - B), (0, K_pad - K)))

    c_p = c
    if (B_pad, H_pad) != c.shape:
        c_p = jnp.pad(c, ((0, B_pad - B), (0, H_pad - H)))
    # NOTE: in an RNN loop carry padded (B_pad, H_pad) h/c across steps so the
    # pads above and slices below vanish and the c donation stays copy-free.

    h_out, c_out = pl.pallas_call(
        lstm_cell_kernel,
        out_shape=(
            jax.ShapeDtypeStruct((B_pad, H_pad), h.dtype),
            jax.ShapeDtypeStruct((B_pad, H_pad), c.dtype),
        ),
        # Hidden-tile OUTER, batch-tile INNER: the weight/bias block index is
        # constant along the inner axis, so each weight slab is DMA'd from HBM
        # once and reused across all batch tiles.
        grid=(nh, nb),
        in_specs=[
            pl.BlockSpec((tb, K_pad), lambda ni, bi: (bi, 0)),              # [x|h]
            pl.BlockSpec((tb, th), lambda ni, bi: (bi, ni)),                # c tile
            pl.BlockSpec((None, K_pad, 4 * th), lambda ni, bi: (ni, 0, 0)),  # W slab
            pl.BlockSpec((None, 1, 4 * th), lambda ni, bi: (ni, 0, 0)),      # bias
        ],
        out_specs=(
            pl.BlockSpec((tb, th), lambda ni, bi: (bi, ni)),                # new_h
            pl.BlockSpec((tb, th), lambda ni, bi: (bi, ni)),                # new_c
        ),
        # Donate the (padded) previous cell-state buffer to the new cell state.
        input_output_aliases={1: 1},
        compiler_params=pltpu.CompilerParams(
            # Independent hidden/batch tiles -> shard across TCs (megacore/v7x).
            dimension_semantics=("parallel", "parallel"),
            vmem_limit_bytes=_vmem_limit_bytes(),
        ),
    )(xh, c_p, w, b)

    if (B_pad, H_pad) == (B, H):
        return h_out, c_out
    return h_out[:B, :H], c_out[:B, :H]


def lstm_cell_ref(x, h, c, weight, bias):
    """Pure-JAX reference (mirrors the PyTorch forward exactly)."""
    H = h.shape[1]
    gates = jnp.concatenate([x, h], axis=1) @ weight.T + bias
    f = jax.nn.sigmoid(gates[:, 0 * H:1 * H])
    i = jax.nn.sigmoid(gates[:, 1 * H:2 * H])
    o = jax.nn.sigmoid(gates[:, 2 * H:3 * H])
    u = jnp.tanh(gates[:, 3 * H:4 * H])
    new_c = i * u + f * c
    new_h = o * jnp.tanh(new_c)
    return new_h, new_c


if __name__ == "__main__":
    batch = 8
    input_size = 16
    hidden_size = 32

    key = jax.random.PRNGKey(0)
    kx, kh, kc, kw, kb = jax.random.split(key, 5)

    x = jax.random.normal(kx, (batch, input_size), dtype=jnp.float32)
    h0 = jax.random.normal(kh, (batch, hidden_size), dtype=jnp.float32)
    c0 = jax.random.normal(kc, (batch, hidden_size), dtype=jnp.float32)

    # Deterministic parameter init (same shapes as nn.Linear(D+H, 4H)).
    fan_in = input_size + hidden_size
    bound = 1.0 / (fan_in ** 0.5)
    weight = jax.random.uniform(kw, (4 * hidden_size, fan_in),
                                minval=-bound, maxval=bound, dtype=jnp.float32)
    bias = jax.random.uniform(kb, (4 * hidden_size,),
                              minval=-bound, maxval=bound, dtype=jnp.float32)

    ref_h, ref_c = lstm_cell_ref(x, h0, c0, weight, bias)

    # 1) Exactness check with an f32 weight stream (tight tolerance).
    params_f32 = prepare_lstm_params(weight, bias, input_size=input_size,
                                     hidden_size=hidden_size,
                                     weight_dtype=jnp.float32)
    new_h, new_c = jax.block_until_ready(lstm_cell(x, h0, c0, params_f32))
    assert jnp.allclose(new_h, ref_h, atol=1e-5, rtol=1e-5)
    assert jnp.allclose(new_c, ref_c, atol=1e-5, rtol=1e-5)

    # 2) Default shipped configuration: bf16 weight/operand stream (halves the
    #    dominant HBM traffic); f32 accumulation -> looser tolerance expected.
    params_bf16 = prepare_lstm_params(weight, bias, input_size=input_size,
                                      hidden_size=hidden_size)  # bf16 default
    new_h_b, new_c_b = jax.block_until_ready(lstm_cell(x, h0, c0, params_bf16))
    assert jnp.allclose(new_h_b, ref_h, atol=5e-2, rtol=5e-2)
    assert jnp.allclose(new_c_b, ref_c, atol=5e-2, rtol=5e-2)

    print("KERNEL_OK")
</pallas_src>

<mosaic_0001>
module attributes {stable_mosaic.version = 11 : i64} {
  func.func @lstm_cell_kernel(%arg0: i32, %arg1: i32, %arg2: memref<8x48xf32, #tpu.memory_space<vmem>>, %arg3: memref<8x128xf32, #tpu.memory_space<vmem>>, %arg4: memref<1x48x512xf32, #tpu.memory_space<vmem>>, %arg5: memref<1x1x512xf32, #tpu.memory_space<vmem>>, %arg6: memref<8x128xf32, #tpu.memory_space<vmem>>, %arg7: memref<8x128xf32, #tpu.memory_space<vmem>>) attributes {dimension_semantics = [#tpu.dimension_semantics<parallel>, #tpu.dimension_semantics<parallel>], iteration_bounds = array<i64: 1, 1>, scalar_prefetch = 0 : i64, scratch_operands = 0 : i64, tpu.core_type = #tpu.core_type<tc>, window_params = [{transform_indices = @transform_0, window_bounds = array<i64: 8, 48>}, {transform_indices = @transform_1, window_bounds = array<i64: 8, 128>}, {transform_indices = @transform_2, window_bounds = array<i64: 1, 48, 512>}, {transform_indices = @transform_3, window_bounds = array<i64: 1, 1, 512>}, {transform_indices = @transform_4, window_bounds = array<i64: 8, 128>}, {transform_indices = @transform_5, window_bounds = array<i64: 8, 128>}]} {
    %c0 = arith.constant 0 : index
    %c0_0 = arith.constant 0 : index
    %0 = vector.load %arg2[%c0, %c0_0] : memref<8x48xf32, #tpu.memory_space<vmem>>, vector<8x48xf32>
    %c0_1 = arith.constant 0 : index
    %c0_2 = arith.constant 0 : index
    %c0_3 = arith.constant 0 : index
    %1 = vector.load %arg4[%c0_1, %c0_2, %c0_3] : memref<1x48x512xf32, #tpu.memory_space<vmem>>, vector<1x48x512xf32>
    %2 = vector.shape_cast %1 : vector<1x48x512xf32> to vector<48x512xf32>
    %cst = arith.constant dense<0.000000e+00> : vector<8x512xf32>
    %3 = tpu.matmul %0, %2, %cst {dimension_numbers = #tpu.dot_dimension_numbers<[1], [0], [0], [1], [0, 0, 1, 1], [], []>} : vector<8x48xf32>, vector<48x512xf32>, vector<8x512xf32> -> vector<8x512xf32>
    %c0_4 = arith.constant 0 : index
    %c0_5 = arith.constant 0 : index
    %c0_6 = arith.constant 0 : index
    %4 = vector.load %arg5[%c0_4, %c0_5, %c0_6] : memref<1x1x512xf32, #tpu.memory_space<vmem>>, vector<1x1x512xf32>
    %5 = vector.shape_cast %4 : vector<1x1x512xf32> to vector<1x512xf32>
    %6 = vector.broadcast %5 : vector<1x512xf32> to vector<8x512xf32>
    %7 = arith.addf %3, %6 : vector<8x512xf32>
    %8 = vector.extract_strided_slice %7 {offsets = [0, 0], sizes = [8, 128], strides = [1, 1]} : vector<8x512xf32> to vector<8x128xf32>
    %9 = arith.negf %8 : vector<8x128xf32>
    %10 = math.exp %9 : vector<8x128xf32>
    %cst_7 = arith.constant 1.000000e+00 : f32
    %11 = vector.broadcast %cst_7 : f32 to vector<8x128xf32>
    %12 = arith.addf %11, %10 : vector<8x128xf32>
    %13 = arith.divf %11, %12 : vector<8x128xf32>
    %14 = vector.extract_strided_slice %7 {offsets = [0, 128], sizes = [8, 128], strides = [1, 1]} : vector<8x512xf32> to vector<8x128xf32>
    %15 = arith.negf %14 : vector<8x128xf32>
    %16 = math.exp %15 : vector<8x128xf32>
    %cst_8 = arith.constant 1.000000e+00 : f32
    %17 = vector.broadcast %cst_8 : f32 to vector<8x128xf32>
    %18 = arith.addf %17, %16 : vector<8x128xf32>
    %19 = arith.divf %17, %18 : vector<8x128xf32>
    %20 = vector.extract_strided_slice %7 {offsets = [0, 256], sizes = [8, 128], strides = [1, 1]} : vector<8x512xf32> to vector<8x128xf32>
    %21 = arith.negf %20 : vector<8x128xf32>
    %22 = math.exp %21 : vector<8x128xf32>
    %cst_9 = arith.constant 1.000000e+00 : f32
    %23 = vector.broadcast %cst_9 : f32 to vector<8x128xf32>
    %24 = arith.addf %23, %22 : vector<8x128xf32>
    %25 = arith.divf %23, %24 : vector<8x128xf32>
    %26 = vector.extract_strided_slice %7 {offsets = [0, 384], sizes = [8, 128], strides = [1, 1]} : vector<8x512xf32> to vector<8x128xf32>
    %27 = math.tanh %26 : vector<8x128xf32>
    %28 = arith.mulf %19, %27 : vector<8x128xf32>
    %c0_10 = arith.constant 0 : index
    %c0_11 = arith.constant 0 : index
    %29 = vector.load %arg3[%c0_10, %c0_11] : memref<8x128xf32, #tpu.memory_space<vmem>>, vector<8x128xf32>
    %30 = arith.mulf %13, %29 : vector<8x128xf32>
    %31 = arith.addf %28, %30 : vector<8x128xf32>
    %32 = math.tanh %31 : vector<8x128xf32>
    %33 = arith.mulf %25, %32 : vector<8x128xf32>
    %c0_12 = arith.constant 0 : index
    %c0_13 = arith.constant 0 : index
    %34 = vector.load %arg7[%c0_12, %c0_13] : memref<8x128xf32, #tpu.memory_space<vmem>>, vector<8x128xf32>
    tpu.vector_store %arg7[%c0_12, %c0_13], %31 {strides = array<i32>} : memref<8x128xf32, #tpu.memory_space<vmem>>, vector<8x128xf32>,
    %c0_14 = arith.constant 0 : index
    %c0_15 = arith.constant 0 : index
    %35 = vector.load %arg6[%c0_14, %c0_15] : memref<8x128xf32, #tpu.memory_space<vmem>>, vector<8x128xf32>
    tpu.vector_store %arg6[%c0_14, %c0_15], %33 {strides = array<i32>} : memref<8x128xf32, #tpu.memory_space<vmem>>, vector<8x128xf32>,
    return
  }
  func.func @transform_0(%arg0: i32, %arg1: i32) -> (i32, i32) {
    %c0_i32 = arith.constant 0 : i32
    %c0_i32_0 = arith.constant 0 : i32
    return %arg1, %c0_i32 : i32, i32
  }
  func.func @transform_1(%arg0: i32, %arg1: i32) -> (i32, i32) {
    %c0_i32 = arith.constant 0 : i32
    return %arg1, %arg0 : i32, i32
  }
  func.func @transform_2(%arg0: i32, %arg1: i32) -> (i32, i32, i32) {
    %c0_i32 = arith.constant 0 : i32
    %c0_i32_0 = arith.constant 0 : i32
    %c0_i32_1 = arith.constant 0 : i32
    return %arg0, %c0_i32, %c0_i32_0 : i32, i32, i32
  }
  func.func @transform_3(%arg0: i32, %arg1: i32) -> (i32, i32, i32) {
    %c0_i32 = arith.constant 0 : i32
    %c0_i32_0 = arith.constant 0 : i32
    %c0_i32_1 = arith.constant 0 : i32
    return %arg0, %c0_i32, %c0_i32_0 : i32, i32, i32
  }
  func.func @transform_4(%arg0: i32, %arg1: i32) -> (i32, i32) {
    %c0_i32 = arith.constant 0 : i32
    return %arg1, %arg0 : i32, i32
  }
  func.func @transform_5(%arg0: i32, %arg1: i32) -> (i32, i32) {
    %c0_i32 = arith.constant 0 : i32
    return %arg1, %arg0 : i32, i32
  }
}

</mosaic_0001>

<llo_original>
// kernel: tpu_custom_call.1
$region0: #{tpu_custom_call.1}
  #allocation0 [shape = 'u32[]', space=smem, size = 0x4, offset = 0x4, fixed_abs, tag = 'smem constant byte address 0x4 - core index']
  #allocation1 [shape = 'u32[144,128]{1,0:T(1,128)}', space=vmem, size = 0x12000, scoped, tag = 'internal scratch']
  %s0 = inlined_call_operand.vmem [shape: f32[8,48], index: 0, kind: input, shape index: {}]
  %s1 = inlined_call_operand.hbm [shape: f32[8,128], index: 1, kind: input, shape index: {}, may-alias: {1,5}]
  %s2 = inlined_call_operand.hbm [shape: f32[1,48,512], index: 2, kind: input, shape index: {}]
  %s3 = inlined_call_operand.vmem [shape: f32[1,1,512], index: 3, kind: input, shape index: {}]
  %s4 = inlined_call_operand.hbm [shape: f32[8,128], index: 4, kind: output, shape index: {0}]
  %s5 = inlined_call_operand.hbm [shape: f32[8,128], index: 5, kind: output, shape index: {1}, may-alias: {1,5}]
  %6 = xla_tuple %s4, %s5
  %s7 = sld [smem:[#allocation0]]
  $region42: #{tpu_custom_call.1} parent=0
    _
  %s9 = ssub.s32 1, %s7
  %s10 = scalar_select 0, %s9, %s7
  $region1: #{tpu_custom_call.1} parent=0
    #allocation2 [shape = 'u8[4096]{0}', space=vmem, size = 0x1000, scoped, tag = 'input window, operand 1, single buffered']
    #allocation3 [shape = 's32[1]{0}', space=sflag, size = 0x4, scoped, tag = 'scoped memory for tpu_custom_call.1']
    #allocation4 [shape = 's32[1]{0}', space=sflag, size = 0x4, scoped, tag = 'scoped memory for tpu_custom_call.1']
    #allocation5 [shape = 'u8[98304]{0}', space=vmem, size = 0x18000, scoped, tag = 'input window, operand 2, single buffered']
    #allocation6 [shape = 's32[1]{0}', space=sflag, size = 0x4, scoped, tag = 'scoped memory for tpu_custom_call.1']
    #allocation7 [shape = 'u8[4096]{0}', space=vmem, size = 0x1000, scoped, tag = 'output window, operand 0, single buffered']
    #allocation8 [shape = 'u8[4096]{0}', space=vmem, size = 0x1000, scoped, tag = 'output window, operand 1, single buffered']
    #allocation9 [shape = 's32[1]{0}', space=sflag, size = 0x4, scoped, tag = 'scoped memory for tpu_custom_call.1']
    %11 = vsyncpa [#allocation3], 0
    %12 = vsyncpa [#allocation6], 0
    %13 = vsyncpa [#allocation4], 0
    %14 = vsyncpa [#allocation9], 0
    // Predicated region
    $region2: #{tpu_custom_call.1} parent=1 // pred_check
      _
    $region3: #{tpu_custom_call.1} parent=1 // pred_check_branch
      %16 = sbr.rel (0) target = $region5
    $region4: #{tpu_custom_call.1} parent=1 // pred_region
      _
    $region5: #{tpu_custom_call.1} parent=1 // pred_fallthru
      _
    // Predicated region
    $region6: #{tpu_custom_call.1} parent=1 // pred_check
      _
    $region7: #{tpu_custom_call.1} parent=1 // pred_check_branch
      %18 = sbr.rel (0) target = $region9
    $region8: #{tpu_custom_call.1} parent=1 // pred_region
      %s20 = ssub.s32 128, 128
      %21 = vsyncadd [#allocation3], %s20
      %s23 = sshll.u32 [#allocation2], 4
      %s24 = int_to_ptr.vmem [resolvable:$true] %s23
      %26 = dma.hbm_to_vmem [thread:$0]  %s1, 128, %s24, [#allocation3]
    $region9: #{tpu_custom_call.1} parent=1 // pred_fallthru
      _
    // Predicated region
    $region10: #{tpu_custom_call.1} parent=1 // pred_check
      _
    $region11: #{tpu_custom_call.1} parent=1 // pred_check_branch
      %28 = sbr.rel (0) target = $region13
    $region12: #{tpu_custom_call.1} parent=1 // pred_region
      %s30 = ssub.s32 3072, 3072
      %31 = vsyncadd [#allocation6], %s30
      %s32 = sshll.u32 [#allocation5], 4
      %s33 = int_to_ptr.vmem [resolvable:$true] %s32
      %38 = dma.hbm_to_vmem [thread:$0]  %s2, 3072, %s33, [#allocation6], 512, 512, 32
    $region13: #{tpu_custom_call.1} parent=1 // pred_fallthru
      _
    // Predicated region
    $region14: #{tpu_custom_call.1} parent=1 // pred_check
      _
    $region15: #{tpu_custom_call.1} parent=1 // pred_check_branch
      %40 = sbr.rel (0) target = $region17
    $region16: #{tpu_custom_call.1} parent=1 // pred_region
      _
    $region17: #{tpu_custom_call.1} parent=1 // pred_fallthru
      _
    // Predicated region
    $region18: #{tpu_custom_call.1} parent=1 // pred_check
      _
    $region19: #{tpu_custom_call.1} parent=1 // pred_check_branch
      %42 = sbr.rel (0) target = $region21
    $region20: #{tpu_custom_call.1} parent=1 // pred_region
      %43 = dma.done [#allocation3], 128
    $region21: #{tpu_custom_call.1} parent=1 // pred_fallthru
      _
    // Predicated region
    $region22: #{tpu_custom_call.1} parent=1 // pred_check
      _
    $region23: #{tpu_custom_call.1} parent=1 // pred_check_branch
      %45 = sbr.rel (0) target = $region25
    $region24: #{tpu_custom_call.1} parent=1 // pred_region
      %46 = dma.done [#allocation6], 3072
    $region25: #{tpu_custom_call.1} parent=1 // pred_fallthru
      _
    %v47 = vld [vmem:[%s0] sm:$0xff]
    %v48 = vld [vmem:[#allocation5] sm:$0xff]
    %v49 = vld [vmem:[#allocation5 + $0x8] sm:$0xff]
    %v50 = vld [vmem:[#allocation5 + $0x10] sm:$0xff]
    %v51 = vld [vmem:[#allocation5 + $0x18] sm:$0xff]
    %v52 = vld [vmem:[#allocation5 + $0x20] sm:$0xff]
    %v53 = vld [vmem:[#allocation5 + $0x28] sm:$0xff]
    %v54 = vld [vmem:[#allocation5 + $0x30] sm:$0xff]
    %v55 = vld [vmem:[#allocation5 + $0x38] sm:$0xff]
    %v56 = vld [vmem:[#allocation5 + $0x40] sm:$0xff]
    %v57 = vld [vmem:[#allocation5 + $0x48] sm:$0xff]
    %v58 = vld [vmem:[#allocation5 + $0x50] sm:$0xff]
    %v59 = vld [vmem:[#allocation5 + $0x58] sm:$0xff]
    %v60 = vld [vmem:[#allocation5 + $0x60] sm:$0xff]
    %v61 = vld [vmem:[#allocation5 + $0x68] sm:$0xff]
    %v62 = vld [vmem:[#allocation5 + $0x70] sm:$0xff]
    %v63 = vld [vmem:[#allocation5 + $0x78] sm:$0xff]
    %v64 = vld [vmem:[#allocation5 + $0x80] sm:$0xff]
    %v65 = vld [vmem:[#allocation5 + $0x88] sm:$0xff]
    %v66 = vld [vmem:[#allocation5 + $0x90] sm:$0xff]
    %v67 = vld [vmem:[#allocation5 + $0x98] sm:$0xff]
    %v68 = vld [vmem:[#allocation5 + $0xa0] sm:$0xff]
    %v69 = vld [vmem:[#allocation5 + $0xa8] sm:$0xff]
    %v70 = vld [vmem:[#allocation5 + $0xb0] sm:$0xff]
    %v71 = vld [vmem:[#allocation5 + $0xb8] sm:$0xff]
    %v72 = vld [vmem:[%s3] sm:$0xf]
    %v74 = vlaneseq
    %v75 = vshrl.u32 %v74, 7
    %v76 = vsub.s32 0, %v75
    %v77 = vrot.slane %v72, %v76
    %v78 = vlaneseq
    %v79 = vshrl.u32 %v78, 7
    %v80 = vsub.s32 1, %v79
    %v81 = vrot.slane %v72, %v80
    %v82 = vlaneseq
    %v83 = vshrl.u32 %v82, 7
    %v84 = vsub.s32 2, %v83
    %v85 = vrot.slane %v72, %v84
    %v86 = vlaneseq
    %v87 = vshrl.u32 %v86, 7
    %v88 = vsub.s32 3, %v87
    %v89 = vrot.slane %v72, %v88
    %vm94 = vcmask 392192
    %v96 = vsel %vm94, %v47, 0
    %98 = vmatprep.subr.mxu0 %v49
    %99 = vmatpush1.msra.mxu0 %v48
    %100 = vmatprep.subr.mxu0 %v53
    %101 = vmatpush1.msra.mxu0 %v52
    %102 = vmatprep.subr.mxu0 %v57
    %103 = vmatpush1.msra.mxu0 %v56
    %104 = vmatprep.subr.mxu0 %v61
    %105 = vmatpush1.msra.mxu0 %v60
    %106 = vmatprep.subr.mxu0 %v65
    %107 = vmatpush1.msra.mxu0 %v64
    %108 = vmatprep.subr.mxu0 %v69
    %109 = vmatpush1.msra.mxu0 %v68
    %110 = vmatprep.subr.mxu0 0.0
    %111 = vmatpush1.msra.mxu0 0.0
    %112 = vmatprep.subr.mxu0 0.0
    %113 = vmatpush1.msra.mxu0 0.0
    %114 = vmatprep.subr.mxu0 0.0
    %115 = vmatpush1.msra.mxu0 0.0
    %116 = vmatprep.subr.mxu0 0.0
    %117 = vmatpush1.msra.mxu0 0.0
    %118 = vmatprep.subr.mxu0 0.0
    %119 = vmatpush1.msra.mxu0 0.0
    %120 = vmatprep.subr.mxu0 0.0
    %121 = vmatpush1.msra.mxu0 0.0
    %122 = vmatprep.subr.mxu0 0.0
    %123 = vmatpush1.msra.mxu0 0.0
    %124 = vmatprep.subr.mxu0 0.0
    %125 = vmatpush1.msra.mxu0 0.0
    %126 = vmatprep.subr.mxu0 0.0
    %127 = vmatpush1.msra.mxu0 0.0
    %128 = vmatprep.subr.mxu0 0.0
    %129 = vmatpush1.msra.mxu0 0.0
    %130 = vmatprep.subr.mxu0 0.0
    %131 = vmatpush1.msra.mxu0 0.0
    %132 = vmatprep.subr.mxu0 0.0
    %133 = vmatpush1.msra.mxu0 0.0
    %134 = vmatprep.subr.mxu0 0.0
    %135 = vmatpush1.msra.mxu0 0.0
    %136 = vmatprep.subr.mxu0 0.0
    %137 = vmatpush1.msra.mxu0 0.0
    %138 = vmatprep.subr.mxu0 0.0
    %139 = vmatpush1.msra.mxu0 0.0
    %140 = vmatprep.subr.mxu0 0.0
    %141 = vmatpush1.msra.mxu0 0.0
    %142 = vmatprep.subr.mxu0 0.0
    %143 = vmatpush1.msra.mxu0 0.0
    %144 = vmatprep.subr.mxu0 0.0
    %145 = vmatpush1.msra.mxu0 0.0
    %146 = vmatprep.subr.mxu0 0.0
    %147 = vmatpush1.msra.mxu0 0.0
    %148 = vmatprep.subr.mxu0 0.0
    %149 = vmatpush1.msra.mxu0 0.0
    %150 = vmatprep.subr.mxu0 0.0
    %151 = vmatpush1.msra.mxu0 0.0
    %152 = vmatprep.subr.mxu0 0.0
    %153 = vmatpush1.msra.mxu0 0.0
    %154 = vmatprep.subr.mxu0 0.0
    %155 = vmatpush1.msra.mxu0 0.0
    %156 = vmatprep.subr.mxu0 0.0
    %157 = vmatpush1.msra.mxu0 0.0
    %158 = vmatprep.subr.mxu0 0.0
    %159 = vmatpush1.msra.mxu0 0.0
    %160 = vmatprep.subr.mxu0 0.0
    %161 = vmatpush1.msra.mxu0 0.0
    %162 = vmatprep.mubr.f32.mxu0 0.0
    %163 = vmatmul.mubr.f32.gmra.mrb[0].mxu0 %v96
    %v164 = vpop.f32.mrb[0].mxu0
    %v165 = vadd.f32 %v77, %v164
    %v166 = vpop.f32.mrb[0].mxu0
    %v167 = vadd.f32 %v81, %v166
    %168 = vdwg.mxu0
    %169 = vmatprep.subr.mxu0 %v51
    %170 = vmatpush1.msra.mxu0 %v50
    %171 = vmatprep.subr.mxu0 %v55
    %172 = vmatpush1.msra.mxu0 %v54
    %173 = vmatprep.subr.mxu0 %v59
    %174 = vmatpush1.msra.mxu0 %v58
    %175 = vmatprep.subr.mxu0 %v63
    %176 = vmatpush1.msra.mxu0 %v62
    %177 = vmatprep.subr.mxu0 %v67
    %178 = vmatpush1.msra.mxu0 %v66
    %179 = vmatprep.subr.mxu0 %v71
    %180 = vmatpush1.msra.mxu0 %v70
    %181 = vmatprep.subr.mxu0 0.0
    %182 = vmatpush1.msra.mxu0 0.0
    %183 = vmatprep.subr.mxu0 0.0
    %184 = vmatpush1.msra.mxu0 0.0
    %185 = vmatprep.subr.mxu0 0.0
    %186 = vmatpush1.msra.mxu0 0.0
    %187 = vmatprep.subr.mxu0 0.0
    %188 = vmatpush1.msra.mxu0 0.0
    %189 = vmatprep.subr.mxu0 0.0
    %190 = vmatpush1.msra.mxu0 0.0
    %191 = vmatprep.subr.mxu0 0.0
    %192 = vmatpush1.msra.mxu0 0.0
    %193 = vmatprep.subr.mxu0 0.0
    %194 = vmatpush1.msra.mxu0 0.0
    %195 = vmatprep.subr.mxu0 0.0
    %196 = vmatpush1.msra.mxu0 0.0
    %197 = vmatprep.subr.mxu0 0.0
    %198 = vmatpush1.msra.mxu0 0.0
    %199 = vmatprep.subr.mxu0 0.0
    %200 = vmatpush1.msra.mxu0 0.0
    %201 = vmatprep.subr.mxu0 0.0
    %202 = vmatpush1.msra.mxu0 0.0
    %203 = vmatprep.subr.mxu0 0.0
    %204 = vmatpush1.msra.mxu0 0.0
    %205 = vmatprep.subr.mxu0 0.0
    %206 = vmatpush1.msra.mxu0 0.0
    %207 = vmatprep.subr.mxu0 0.0
    %208 = vmatpush1.msra.mxu0 0.0
    %209 = vmatprep.subr.mxu0 0.0
    %210 = vmatpush1.msra.mxu0 0.0
    %211 = vmatprep.subr.mxu0 0.0
    %212 = vmatpush1.msra.mxu0 0.0
    %213 = vmatprep.subr.mxu0 0.0
    %214 = vmatpush1.msra.mxu0 0.0
    %215 = vmatprep.subr.mxu0 0.0
    %216 = vmatpush1.msra.mxu0 0.0
    %217 = vmatprep.subr.mxu0 0.0
    %218 = vmatpush1.msra.mxu0 0.0
    %219 = vmatprep.subr.mxu0 0.0
    %220 = vmatpush1.msra.mxu0 0.0
    %221 = vmatprep.subr.mxu0 0.0
    %222 = vmatpush1.msra.mxu0 0.0
    %223 = vmatprep.subr.mxu0 0.0
    %224 = vmatpush1.msra.mxu0 0.0
    %225 = vmatprep.subr.mxu0 0.0
    %226 = vmatpush1.msra.mxu0 0.0
    %227 = vmatprep.subr.mxu0 0.0
    %228 = vmatpush1.msra.mxu0 0.0
    %229 = vmatprep.subr.mxu0 0.0
    %230 = vmatpush1.msra.mxu0 0.0
    %231 = vmatprep.subr.mxu0 0.0
    %232 = vmatpush1.msra.mxu0 0.0
    %233 = vmatprep.mubr.f32.mxu0 0.0
    %234 = vmatmul.mubr.f32.gmra.mrb[0].mxu0 %v96
    %v235 = vpop.f32.mrb[0].mxu0
    %v236 = vadd.f32 %v85, %v235
    %v237 = vpop.f32.mrb[0].mxu0
    %v238 = vadd.f32 %v89, %v237
    %239 = vdwg.mxu0
    %v240 = vxor.u32 %v165, 2147483648
    %v241 = vmul.f32 %v240, 1.442695
    %v242 = vpow.pop %v241
    %v243 = vadd.f32 %v242, 1.0
    %v244 = vrcp.pop %v243
    %v245 = vmul.f32 1.0, %v244
    %v246 = vxor.u32 %v167, 2147483648
    %v247 = vmul.f32 %v246, 1.442695
    %v248 = vpow.pop %v247
    %v249 = vadd.f32 %v248, 1.0
    %v250 = vrcp.pop %v249
    %v251 = vmul.f32 1.0, %v250
    %v252 = vxor.u32 %v236, 2147483648
    %v253 = vmul.f32 %v252, 1.442695
    %v254 = vpow.pop %v253
    %v255 = vadd.f32 %v254, 1.0
    %v256 = vrcp.pop %v255
    %v257 = vmul.f32 1.0, %v256
    %v258 = vtanh.pop %v238
    %v259 = vmul.f32 %v251, %v258
    %v260 = vld [vmem:[#allocation2] sm:$0xff]
    %v261 = vmul.f32 %v245, %v260
    %v262 = vadd.f32 %v259, %v261
    %v263 = vtanh.pop %v262
    %v264 = vmul.f32 %v257, %v263
    %265 = vst [vmem:[#allocation8] sm:$0xff] %v262
    %266 = vst [vmem:[#allocation7] sm:$0xff] %v264
    // Predicated region
    $region26: #{tpu_custom_call.1} parent=1 // pred_check
      _
    $region27: #{tpu_custom_call.1} parent=1 // pred_check_branch
      %268 = sbr.rel (0) target = $region29
    $region28: #{tpu_custom_call.1} parent=1 // pred_region
      %s270 = ssub.s32 128, 128
      %271 = vsyncadd [#allocation4], %s270
      %s273 = sshll.u32 [#allocation7], 4
      %s274 = int_to_ptr.vmem [resolvable:$true] %s273
      %276 = dma.vmem_to_hbm [thread:$0]  %s274, 128, %s4, [#allocation4]
    $region29: #{tpu_custom_call.1} parent=1 // pred_fallthru
      _
    // Predicated region
    $region30: #{tpu_custom_call.1} parent=1 // pred_check
      _
    $region31: #{tpu_custom_call.1} parent=1 // pred_check_branch
      %278 = sbr.rel (0) target = $region33
    $region32: #{tpu_custom_call.1} parent=1 // pred_region
      %s280 = ssub.s32 128, 128
      %281 = vsyncadd [#allocation9], %s280
      %s283 = sshll.u32 [#allocation8], 4
      %s284 = int_to_ptr.vmem [resolvable:$true] %s283
      %286 = dma.vmem_to_hbm [thread:$0]  %s284, 128, %s5, [#allocation9]
    $region33: #{tpu_custom_call.1} parent=1 // pred_fallthru
      _
    // Predicated region
    $region34: #{tpu_custom_call.1} parent=1 // pred_check
      _
    $region35: #{tpu_custom_call.1} parent=1 // pred_check_branch
      %288 = sbr.rel (0) target = $region37
    $region36: #{tpu_custom_call.1} parent=1 // pred_region
      %289 = dma.done [#allocation4], 128
    $region37: #{tpu_custom_call.1} parent=1 // pred_fallthru
      _
    // Predicated region
    $region38: #{tpu_custom_call.1} parent=1 // pred_check
      _
    $region39: #{tpu_custom_call.1} parent=1 // pred_check_branch
      %291 = sbr.rel (0) target = $region41
    $region40: #{tpu_custom_call.1} parent=1 // pred_region
      %292 = dma.done [#allocation9], 128
    $region41: #{tpu_custom_call.1} parent=1 // pred_fallthru
      _
    %293 = vsyncpa [#allocation3], 1
    %294 = vsyncpa [#allocation6], 1
    %295 = vsyncpa [#allocation4], 1
    %296 = vsyncpa [#allocation9], 1

</llo_original>
